<compile_context>
chip_gen: v5e
topology: v5e:2x2
jax: 0.10.0
libtpu: 0.0.40
codegen_flags: <defaults>
</compile_context>

<pallas_src>
import jax
import jax.numpy as jnp
from jax.experimental import pallas as pl
from jax.experimental.pallas import tpu as pltpu

# ----------------------------- configuration ------------------------------
MAX_DOC_LENGTH = 16      # D  (Conv1d in_channels)
NFILTERS = 16            # F  (Conv1d out_channels, fc2 width)
LOCAL_FILTER_SIZE = 3    # K  (Conv1d kernel size)
MAX_QUERY_LENGTH = 8     # Qout (fc1 in_features)
DROPOUT = 0.0            # eval mode -> identity

EMB = 32                 # E  embedding dim (contracted by the interaction)
BATCH = 2                # B
NCLICKS = 4              # C
QIN = MAX_QUERY_LENGTH + LOCAL_FILTER_SIZE - 1   # 10, query length at input

D, F, K = MAX_DOC_LENGTH, NFILTERS, LOCAL_FILTER_SIZE
QOUT, C, B = MAX_QUERY_LENGTH, NCLICKS, BATCH
CD = C * D               # 64   per-batch interaction lane width
CF = C * F               # 64   per-batch activation lane width
LANE = 128
QPAD = 16                # QIN padded up to a sublane multiple
NROWS = B * QPAD         # 32   row r = QPAD*b + query position
BCD = B * CD             # 128  lane m = CD*b + D*c + d  (full vreg width)

assert QIN <= QPAD and B <= 8 and BCD == LANE

# Packed f32 parameter slab layout (rows, 128); every block is 8-row aligned.
R_WK = 0                         # K x (BCD, CF)  per-tap conv weights
R_MASK = R_WK + K * BCD          # 384 (NROWS, 128) batch-block 0/1 mask
R_S = R_MASK + NROWS             # 416 (B, NROWS)  fc1 row-selector
R_W2 = R_S + 8                   # 424 (CF, CF)    fc2 block-diagonal
R_W3 = R_W2 + CF                 # 488 (CF, 128)   fc3 selector (cols >= C zero)
R_BCONV = R_W3 + CF              # 552 (1, CF)     conv bias tiled per click
R_B1 = R_BCONV + 8               # 560 (1, CF)     fc1 bias replicated
R_B2 = R_B1 + 8                  # 568 (1, CF)     fc2 bias tiled per click
R_B3 = R_B2 + 8                  # 576 (1, 128)    fc3 bias (lanes >= C zero)
SLAB_ROWS = R_B3 + 8             # 584


# --------------------- sublane-roll direction self-check -------------------
# We need rolled[r] == x[r + k].  With jnp.roll-compatible semantics that is
# shift = -k == NROWS - k.  A one-off probe locks the direction on the actual
# backend so a sign-convention difference can never silently flip the taps.
_TAP_SHIFT = [(NROWS - k) % NROWS for k in range(K)]
_ROLL_PROBED = False


def _probe_roll_direction():
    global _ROLL_PROBED, _TAP_SHIFT
    if _ROLL_PROBED:
        return

    def probe_kernel(x_ref, o_ref):
        o_ref[...] = pltpu.roll(x_ref[...], 1, 0)

    x = jnp.arange(8 * 128, dtype=jnp.float32).reshape(8, 128)
    y = pl.pallas_call(
        probe_kernel, out_shape=jax.ShapeDtypeStruct((8, 128), jnp.float32))(x)
    if bool(jnp.array_equal(y, jnp.roll(x, 1, axis=0))):
        _TAP_SHIFT = [(NROWS - k) % NROWS for k in range(K)]   # jnp.roll sign
    elif bool(jnp.array_equal(y, jnp.roll(x, -1, axis=0))):
        _TAP_SHIFT = list(range(K))                            # flipped sign
    else:
        raise RuntimeError("pltpu.roll probe returned an unexpected rotation")
    _ROLL_PROBED = True


# ------------------------------ Pallas kernel ------------------------------
def local_model_kernel(q_ref, clk_ref, p_ref, out_ref):
    """LocalModel forward for all B batches x C clicks in one invocation.

    q_ref   (NROWS, E)       bf16  zero-padded queries, row = QPAD*b + qpos
    clk_ref (E, BCD)         bf16  clicks, lane = CD*b + D*c + d (E on sublanes)
    p_ref   (SLAB_ROWS, 128) f32   packed weights / biases / mask (R_* offsets)
    out_ref (B, 128)         f32   scores in lanes [0, C), zeros elsewhere
    """
    # 1) Interaction: ONE lane-dense bf16 MXU matmul for all batches & clicks.
    raw = jnp.dot(q_ref[...], clk_ref[...],
                  preferred_element_type=jnp.float32)          # (NROWS, BCD)
    mask = p_ref[R_MASK:R_MASK + NROWS, :]                     # 0/1 batch mask
    inter = jnp.tanh(raw) * mask                               # zero cross-batch
    xm = inter.astype(jnp.bfloat16)                            # bf16 MXU feed

    # 2) Conv1d(D -> F, K): K per-tap matmuls on the unshifted interaction;
    #    the qo+k row shift is a sublane roll (XLU), no misaligned slices.
    acc = None
    for k in range(K):
        wk = p_ref[R_WK + k * BCD:R_WK + (k + 1) * BCD, 0:CF].astype(jnp.bfloat16)
        pk = jnp.dot(xm, wk, preferred_element_type=jnp.float32)   # (NROWS, CF)
        if k:
            pk = pltpu.roll(pk, _TAP_SHIFT[k], 0)              # rows: out[r]=pk[r+k]
        acc = pk if acc is None else acc + pk
    bconv = p_ref[R_BCONV:R_BCONV + 1, 0:CF]
    conv_act = jnp.tanh(acc + bconv)                           # (NROWS, CF)

    # 3) fc1: Linear(Qout -> 1) as a tiny (B, NROWS)@(NROWS, CF) selector
    #    matmul; the selector zeroes padded / invalid rows.  Kept in f32.
    s_sel = p_ref[R_S:R_S + B, 0:NROWS]
    b1 = p_ref[R_B1:R_B1 + 1, 0:CF]
    m1 = jnp.tanh(jnp.dot(s_sel, conv_act,
                          preferred_element_type=jnp.float32) + b1)   # (B, CF)

    # 4) fc2: per-click block-diagonal matmul keeps the lane dim at C*F (f32).
    w2 = p_ref[R_W2:R_W2 + CF, 0:CF]
    b2 = p_ref[R_B2:R_B2 + 1, 0:CF]
    m2 = jnp.tanh(jnp.dot(m1, w2, preferred_element_type=jnp.float32) + b2)
    # TODO(synk): nn.Dropout is identity in eval mode (dropout=0.0); the
    # training-mode random mask is not implemented (inference semantics only).

    # 5) fc3: selector matmul straight into the lane-dense (B, 128) output
    #    tile; lanes >= C come out exactly zero (w3 cols and b3 lanes are 0).
    w3 = p_ref[R_W3:R_W3 + CF, :]
    b3 = p_ref[R_B3:R_B3 + 1, :]
    out_ref[...] = jnp.tanh(jnp.dot(m2, w3,
                                    preferred_element_type=jnp.float32) + b3)


# --------------------------- parameter packing -----------------------------
def pack_params(params):
    """One-time re-layout of the 8 PyTorch parameters (plus the batch-block
    mask) into a single lane-dense f32 (SLAB_ROWS, 128) slab: one DMA."""
    eye_c = jnp.eye(C, dtype=jnp.float32)
    slab = jnp.zeros((SLAB_ROWS, LANE), jnp.float32)

    # Conv1d weight (F, D, K) -> per-tap (D, F) blocks, block-diag per click,
    # tiled over the B batch blocks of the 128-wide interaction lanes.
    w_kdf = jnp.transpose(params['conv_w'], (2, 1, 0))               # (K, D, F)
    for k in range(K):
        blk = jnp.kron(eye_c, w_kdf[k])                              # (CD, CF)
        slab = slab.at[R_WK + k * BCD:R_WK + (k + 1) * BCD, :CF].set(
            jnp.tile(blk, (B, 1)))                                   # (BCD, CF)

    # Batch-block mask: mask[r, m] = 1 iff row r and lane m belong to the
    # same batch (r // QPAD == m // CD).
    rows = jnp.arange(NROWS) // QPAD
    cols = jnp.arange(BCD) // CD
    slab = slab.at[R_MASK:R_MASK + NROWS, :BCD].set(
        (rows[:, None] == cols[None, :]).astype(jnp.float32))

    # fc1 row selector: S[b, QPAD*b + qo] = w1[qo] for qo < QOUT, else 0.
    s_sel = jnp.zeros((B, NROWS), jnp.float32)
    for b in range(B):
        s_sel = s_sel.at[b, b * QPAD:b * QPAD + QOUT].set(params['fc1_w'][0])
    slab = slab.at[R_S:R_S + B, :NROWS].set(s_sel)

    slab = slab.at[R_W2:R_W2 + CF, :CF].set(jnp.kron(eye_c, params['fc2_w'].T))
    slab = slab.at[R_W3:R_W3 + CF, :C].set(
        jnp.kron(eye_c, params['fc3_w'][0][:, None]))                # (CF, C)

    slab = slab.at[R_BCONV, :CF].set(jnp.tile(params['conv_b'], C))
    slab = slab.at[R_B1, :CF].set(jnp.full((CF,), params['fc1_b'][0], jnp.float32))
    slab = slab.at[R_B2, :CF].set(jnp.tile(params['fc2_b'], C))
    slab = slab.at[R_B3, :C].set(jnp.full((C,), params['fc3_b'][0], jnp.float32))
    return slab


# ------------------------------ JAX wrapper --------------------------------
@jax.jit
def _forward_jit(batch_queries, batch_clicks, param_slab):
    # Host/XLA-side re-layout (HBM side, essentially free):
    #   * queries zero-padded QIN -> QPAD and flattened to (B*QPAD, E) rows
    #   * clicks pre-transposed to (E, B*C*D) so the contraction dim E sits on
    #     sublanes of the RHS (no in-kernel XLU transpose), full 128-lane tile
    #   * both cast to bf16: native MXU feed + half the activation DMA bytes
    q = jnp.zeros((B, QPAD, EMB), jnp.float32).at[:, :QIN, :].set(
        batch_queries.astype(jnp.float32))
    q_rows = q.reshape(B * QPAD, EMB).astype(jnp.bfloat16)
    clk_em = jnp.transpose(batch_clicks.astype(jnp.float32),
                           (3, 0, 1, 2)).reshape(EMB, BCD).astype(jnp.bfloat16)

    vmem = pl.BlockSpec(memory_space=pltpu.MemorySpace.VMEM)
    # Gridless, everything in VMEM: 3 input DMAs, one lane-dense output tile.
    # At production batch sizes: add a "parallel" grid axis over B (v7x dual
    # TensorCore) and size the B-tile against 64 MiB VMEM / vmem_limit_bytes.
    score = pl.pallas_call(
        local_model_kernel,
        out_shape=jax.ShapeDtypeStruct((B, LANE), jnp.float32),
        in_specs=[vmem, vmem, vmem],
        out_specs=vmem,
    )(q_rows, clk_em, param_slab)
    return score[:, :C]                                          # (B, C)


def local_model_forward(batch_queries, batch_clicks, param_slab):
    assert batch_queries.shape == (B, QIN, EMB)
    assert batch_clicks.shape == (B, C, D, EMB)
    _probe_roll_direction()          # one-off, before the kernel traces
    return _forward_jit(batch_queries, batch_clicks, param_slab)


# --------------------------- pure-JAX reference ----------------------------
def reference_forward(batch_queries, batch_clicks, params):
    hi = jax.lax.Precision.HIGHEST
    B_, Qin, E = batch_queries.shape
    _, C_, D_, _ = batch_clicks.shape
    N = B_ * C_
    q = jnp.broadcast_to(batch_queries.astype(jnp.float32)[:, None],
                         (B_, C_, Qin, E)).reshape(N, Qin, E)
    docs = batch_clicks.astype(jnp.float32).reshape(N, D_, E)
    inter = jnp.tanh(jnp.einsum('nqe,nde->ndq', q, docs, precision=hi))
    conv = jax.lax.conv_general_dilated(
        inter, params['conv_w'], window_strides=(1,), padding='VALID',
        dimension_numbers=('NCH', 'OIH', 'NCH'), precision=hi)      # (N, F, Qout)
    conv = jnp.tanh(conv + params['conv_b'][None, :, None])
    m1 = jnp.tanh(jnp.einsum('nfq,q->nf', conv, params['fc1_w'][0], precision=hi)
                  + params['fc1_b'][0])
    m2 = jnp.tanh(jnp.dot(m1, params['fc2_w'].T, precision=hi) + params['fc2_b'])
    score = jnp.tanh(jnp.dot(m2, params['fc3_w'].T, precision=hi) + params['fc3_b'])
    return score.reshape(B_, C_)


# ------------------------- deterministic parameters ------------------------
def init_params(key):
    ks = jax.random.split(key, 8)
    s = 0.1
    return dict(
        conv_w=s * jax.random.normal(ks[0], (NFILTERS, MAX_DOC_LENGTH,
                                             LOCAL_FILTER_SIZE), jnp.float32),
        conv_b=s * jax.random.normal(ks[1], (NFILTERS,), jnp.float32),
        fc1_w=s * jax.random.normal(ks[2], (1, MAX_QUERY_LENGTH), jnp.float32),
        fc1_b=s * jax.random.normal(ks[3], (1,), jnp.float32),
        fc2_w=s * jax.random.normal(ks[4], (NFILTERS, NFILTERS), jnp.float32),
        fc2_b=s * jax.random.normal(ks[5], (NFILTERS,), jnp.float32),
        fc3_w=s * jax.random.normal(ks[6], (1, NFILTERS), jnp.float32),
        fc3_b=s * jax.random.normal(ks[7], (1,), jnp.float32),
    )


if __name__ == "__main__":
    key = jax.random.PRNGKey(0)
    kq, kc, kp = jax.random.split(key, 3)
    batch_queries = jax.random.normal(kq, (BATCH, QIN, EMB), jnp.float32)
    batch_clicks = jax.random.normal(
        kc, (BATCH, NCLICKS, MAX_DOC_LENGTH, EMB), jnp.float32)
    params = init_params(kp)

    param_slab = pack_params(params)          # one-time weight re-layout
    out = local_model_forward(batch_queries, batch_clicks, param_slab)
    out = jax.block_until_ready(out)

    ref = reference_forward(batch_queries, batch_clicks, params)
    assert out.shape == (BATCH, NCLICKS), out.shape
    # bf16 MXU operands (interaction + conv taps) with f32 accumulation and
    # f32 elementwise math: expected error vs the f32 reference is O(1e-4).
    assert jnp.allclose(out, ref, atol=2e-3, rtol=2e-3), (out, ref)
    print("KERNEL_OK")
</pallas_src>

<mosaic_0001>
module attributes {stable_mosaic.version = 11 : i64} {
  func.func @probe_kernel(%arg0: memref<8x128xf32, #tpu.memory_space<vmem>>, %arg1: memref<8x128xf32, #tpu.memory_space<vmem>>) attributes {dimension_semantics = [], scalar_prefetch = 0 : i64, scratch_operands = 0 : i64, tpu.core_type = #tpu.core_type<tc>} {
    %c0 = arith.constant 0 : index
    %c0_0 = arith.constant 0 : index
    %0 = vector.load %arg0[%c0, %c0_0] : memref<8x128xf32, #tpu.memory_space<vmem>>, vector<8x128xf32>
    %c1_i32 = arith.constant 1 : i32
    %1 = tpu.dynamic_rotate %0 by %c1_i32 dim 0 : vector<8x128xf32>, i32 -> vector<8x128xf32>
    %c0_1 = arith.constant 0 : index
    %c0_2 = arith.constant 0 : index
    %2 = vector.load %arg1[%c0_1, %c0_2] : memref<8x128xf32, #tpu.memory_space<vmem>>, vector<8x128xf32>
    tpu.vector_store %arg1[%c0_1, %c0_2], %1 {strides = array<i32>} : memref<8x128xf32, #tpu.memory_space<vmem>>, vector<8x128xf32>,
    return
  }
}

</mosaic_0001>

<llo_original>
// kernel: tpu_custom_call.1
$region0: #{tpu_custom_call.1}
  #allocation0 [shape = 'u32[]', space=smem, size = 0x4, offset = 0x4, fixed_abs, tag = 'smem constant byte address 0x4 - core index']
  #allocation1 [shape = 'u32[72,128]{1,0:T(1,128)}', space=vmem, size = 0x9000, scoped, tag = 'internal scratch']
  %s0 = inlined_call_operand.hbm [shape: f32[8,128], index: 0, kind: input, shape index: {}]
  %s1 = inlined_call_operand.hbm [shape: f32[8,128], index: 1, kind: output, shape index: {}]
  %s2 = sld [smem:[#allocation0]]
  $region18: #{tpu_custom_call.1} parent=0
    _
  %s4 = ssub.s32 1, %s2
  %s5 = scalar_select 0, %s4, %s2
  $region1: #{tpu_custom_call.1} parent=0
    #allocation2 [shape = 'u8[4096]{0}', space=vmem, size = 0x1000, scoped, tag = 'input window, operand 0, single buffered']
    #allocation3 [shape = 's32[1]{0}', space=sflag, size = 0x4, scoped, tag = 'scoped memory for tpu_custom_call.1']
    #allocation4 [shape = 's32[1]{0}', space=sflag, size = 0x4, scoped, tag = 'scoped memory for tpu_custom_call.1']
    #allocation5 [shape = 'u8[4096]{0}', space=vmem, size = 0x1000, scoped, tag = 'output window, operand 0, single buffered']
    %6 = vsyncpa [#allocation3], 0
    %7 = vsyncpa [#allocation4], 0
    // Predicated region
    $region2: #{tpu_custom_call.1} parent=1 // pred_check
      _
    $region3: #{tpu_custom_call.1} parent=1 // pred_check_branch
      %9 = sbr.rel (0) target = $region5
    $region4: #{tpu_custom_call.1} parent=1 // pred_region
      %11 = vsyncadd [#allocation3], 0
      %s13 = sshll.u32 %s0, 4
      %s14 = int_to_ptr.hbm [resolvable:$true] %s13
      %s15 = sshll.u32 [#allocation2], 4
      %s16 = int_to_ptr.vmem [resolvable:$true] %s15
      %18 = dma.hbm_to_vmem [thread:$0]  %s14, 128, %s16, [#allocation3]
    $region5: #{tpu_custom_call.1} parent=1 // pred_fallthru
      _
    // Predicated region
    $region6: #{tpu_custom_call.1} parent=1 // pred_check
      _
    $region7: #{tpu_custom_call.1} parent=1 // pred_check_branch
      %20 = sbr.rel (0) target = $region9
    $region8: #{tpu_custom_call.1} parent=1 // pred_region
      %22 = dma.done [#allocation3], 128
    $region9: #{tpu_custom_call.1} parent=1 // pred_fallthru
      _
    %v23 = vld [vmem:[#allocation2] sm:$0xff]
    %v24 = vrot.slane %v23, 7
    %25 = vst [vmem:[#allocation5] sm:$0xff] %v24
    // Predicated region
    $region10: #{tpu_custom_call.1} parent=1 // pred_check
      _
    $region11: #{tpu_custom_call.1} parent=1 // pred_check_branch
      %27 = sbr.rel (0) target = $region13
    $region12: #{tpu_custom_call.1} parent=1 // pred_region
      %29 = vsyncadd [#allocation4], 0
      %s31 = sshll.u32 [#allocation5], 4
      %s32 = int_to_ptr.vmem [resolvable:$true] %s31
      %s33 = sshll.u32 %s1, 4
      %s34 = int_to_ptr.hbm [resolvable:$true] %s33
      %36 = dma.vmem_to_hbm [thread:$0]  %s32, 128, %s34, [#allocation4]
    $region13: #{tpu_custom_call.1} parent=1 // pred_fallthru
      _
    // Predicated region
    $region14: #{tpu_custom_call.1} parent=1 // pred_check
      _
    $region15: #{tpu_custom_call.1} parent=1 // pred_check_branch
      %38 = sbr.rel (0) target = $region17
    $region16: #{tpu_custom_call.1} parent=1 // pred_region
      %40 = dma.done [#allocation4], 128
    $region17: #{tpu_custom_call.1} parent=1 // pred_fallthru
      _
    %41 = vsyncpa [#allocation3], 1
    %42 = vsyncpa [#allocation4], 1

</llo_original>
